<compile_context>
chip_gen: v7x
topology: tpu7x:2x2x1
jax: 0.10.0
libtpu: 0.0.40
codegen_flags: <defaults>
</compile_context>

<pallas_src>
import functools

import jax
import jax.numpy as jnp
from jax import lax
from jax.experimental import pallas as pl
from jax.experimental.pallas import tpu as pltpu


def _vmem_limit_bytes():
    """Per-generation VMEM limit: physical capacity minus headroom
    (v5e/v6e: 128 MiB -> ~112 MiB, v7x: 64 MiB -> 48 MiB).
    Falls back to a conservative 48 MiB if the query fails."""
    cap = 0
    try:
        cap = int(getattr(pltpu.get_tpu_info(), "vmem_capacity_bytes", 0) or 0)
    except Exception:
        cap = 0
    if cap <= 0:
        return 48 * 1024 * 1024
    return max(cap - 16 * 1024 * 1024, (cap * 3) // 4)


def gat_project_kernel(x_ref, w_ref, a1_ref, a2t_ref, wh_ref, f1_ref, f2t_ref):
    """Wh for all heads (lane-dense) + precomputed attention terms per row tile."""
    xw = jnp.dot(x_ref[...], w_ref[...],
                 preferred_element_type=jnp.float32)          # (tq, nheads*nhid)
    wh_ref[...] = xw                                          # lane-dense store
    # f1[i, h] = Wh_h[i] . a1_h   -> (tq, nheads), consumed as (tq,1) columns
    f1_ref[...] = jnp.dot(xw, a1_ref[...],
                          preferred_element_type=jnp.float32)
    # f2t[h, i] = Wh_h[i] . a2_h  -> (nheads, tq), consumed as (1,tk) rows
    f2t_ref[...] = lax.dot_general(a2t_ref[...], xw, (((1,), (1,)), ((), ())),
                                   preferred_element_type=jnp.float32)


def gat_attention_kernel(adj_ref, whk_ref, f1_ref, f2t_ref, out_ref,
                         m_scr, l_scr, acc_scr, *, alpha, nheads, nhid, mm_dtype):
    k = pl.program_id(1)
    nk = pl.num_programs(1)
    tq = out_ref.shape[0]
    tk = adj_ref.shape[1]

    # Fresh online-softmax state for this row tile at the first key tile.
    @pl.when(k == 0)
    def _init():
        m_scr[...] = jnp.full(m_scr.shape, -jnp.inf, dtype=jnp.float32)
        l_scr[...] = jnp.zeros(l_scr.shape, dtype=jnp.float32)
        acc_scr[...] = jnp.zeros(acc_scr.shape, dtype=jnp.float32)

    adjf = adj_ref[...].astype(jnp.float32)        # (tq, tk); int8/bf16 in HBM
    pos = adjf > 0.0                               # mask shared by all heads
    whk = whk_ref[...]                             # (tk, nheads*nhid) f32
    whk_mm = whk.astype(mm_dtype)                  # cast once per tile
    f1_all = f1_ref[...]                           # (tq, nheads)
    f2_all = f2t_ref[...]                          # (nheads, tk)
    ones_col = jnp.ones((tk, 1), dtype=jnp.float32)

    for h in range(nheads):                        # static unroll over heads
        e = f1_all[:, h:h + 1] + f2_all[h:h + 1, :]      # (tq, tk)
        e = jnp.maximum(e, alpha * e)                    # LeakyReLU (0<alpha<1)
        s = jnp.where(pos, e, -9.0e15)                   # adjacency mask

        m_prev = m_scr[h]
        m_new = jnp.maximum(m_prev, jnp.max(s, axis=1, keepdims=True))
        corr = jnp.exp(m_prev - m_new)                   # (tq, 1)
        p = jnp.exp(s - m_new)                           # (tq, tk)

        # Softmax denominator = unweighted sum of p (matches torch softmax);
        # done on the (otherwise idle) MXU to keep XLU/VALU slots free.
        l_scr[h] = corr * l_scr[h] + jnp.dot(
            p, ones_col, preferred_element_type=jnp.float32)
        # Numerator keeps the module's explicit post-softmax `adj *` weighting.
        pw = (adjf * p).astype(mm_dtype)
        acc_scr[h] = corr * acc_scr[h] + jnp.dot(
            pw, whk_mm[:, h * nhid:(h + 1) * nhid],
            preferred_element_type=jnp.float32)
        m_scr[h] = m_new

    # Single store per row tile: per-head normalization + mean over heads (f32).
    @pl.when(k == nk - 1)
    def _finalize():
        total = jnp.zeros((tq, nhid), dtype=jnp.float32)
        for hh in range(nheads):                         # static unroll
            total += acc_scr[hh] * (1.0 / l_scr[hh])
        out_ref[...] = (total * (1.0 / nheads)).astype(out_ref.dtype)


def gat_forward(x, adj, W, a, *, alpha, tile_q=256, tile_k=512,
                mm_dtype=jnp.float32):
    """x: (N, Fin), adj: (N, N) any dtype (f32 / bf16 / int8 mask),
    W: (nheads, Fin, nhid), a: (nheads, 2*nhid, 1).  Returns (N, nhid)."""
    N, fin = x.shape
    nheads, fin2, nhid = W.shape
    H = nheads * nhid
    assert fin == fin2 and adj.shape == (N, N) and a.shape == (nheads, 2 * nhid, 1)

    tq = min(tile_q, N)
    tk = min(tile_k, N)
    assert N % tq == 0 and N % tk == 0, "N must divide the chosen node tiles"

    vmem_limit = _vmem_limit_bytes()

    # Weight-layout plumbing (host side, tiny):
    #   w_all[:, h*nhid:(h+1)*nhid] == W[h]
    W = W.astype(jnp.float32)
    w_all = jnp.transpose(W, (1, 0, 2)).reshape(fin, H)
    eye = jnp.eye(nheads, dtype=jnp.float32)
    a_src = a[:, :nhid, 0].astype(jnp.float32)                 # (nheads, nhid)
    a_dst = a[:, nhid:, 0].astype(jnp.float32)                 # (nheads, nhid)
    A1 = (a_src[:, :, None] * eye[:, None, :]).reshape(H, nheads)   # (H, nheads)
    A2t = (a_dst[:, None, :] * eye[:, :, None]).reshape(nheads, H)  # (nheads, H)

    # ---- 1) projection: Wh (lane-dense) + attention terms ------------------
    wh, f_src, f_dst_t = pl.pallas_call(
        gat_project_kernel,
        out_shape=(jax.ShapeDtypeStruct((N, H), jnp.float32),
                   jax.ShapeDtypeStruct((N, nheads), jnp.float32),
                   jax.ShapeDtypeStruct((nheads, N), jnp.float32)),
        grid_spec=pltpu.PrefetchScalarGridSpec(
            num_scalar_prefetch=0,
            grid=(N // tq,),
            in_specs=[
                pl.BlockSpec((tq, fin), lambda i: (i, 0)),     # x row tile
                pl.BlockSpec((fin, H), lambda i: (0, 0)),      # all head weights
                pl.BlockSpec((H, nheads), lambda i: (0, 0)),   # a1 (block-diag)
                pl.BlockSpec((nheads, H), lambda i: (0, 0)),   # a2^T (block-diag)
            ],
            out_specs=[
                pl.BlockSpec((tq, H), lambda i: (i, 0)),       # Wh lane-dense
                pl.BlockSpec((tq, nheads), lambda i: (i, 0)),  # f1 columns
                pl.BlockSpec((nheads, tq), lambda i: (0, i)),  # f2 rows (lane-dense)
            ],
        ),
        compiler_params=pltpu.CompilerParams(
            dimension_semantics=("parallel",),
            vmem_limit_bytes=vmem_limit),
    )(x.astype(jnp.float32), w_all, A1, A2t)

    # ---- 2) streaming attention: grid (q_tile, k_tile), heads unrolled -----
    grid = (N // tq, N // tk)
    out = pl.pallas_call(
        functools.partial(gat_attention_kernel, alpha=float(alpha),
                          nheads=nheads, nhid=nhid, mm_dtype=mm_dtype),
        out_shape=jax.ShapeDtypeStruct((N, nhid), jnp.float32),
        grid_spec=pltpu.PrefetchScalarGridSpec(
            num_scalar_prefetch=0,
            grid=grid,
            in_specs=[
                pl.BlockSpec((tq, tk), lambda q, k: (q, k)),      # adj tile (N^2 stream)
                pl.BlockSpec((tk, H), lambda q, k: (k, 0)),       # Wh key rows (all heads)
                pl.BlockSpec((tq, nheads), lambda q, k: (q, 0)),  # f1 (resident over k)
                pl.BlockSpec((nheads, tk), lambda q, k: (0, k)),  # f2 rows
            ],
            out_specs=pl.BlockSpec((tq, nhid), lambda q, k: (q, 0)),
            scratch_shapes=[
                pltpu.VMEM((nheads, tq, 1), jnp.float32),      # running max
                pltpu.VMEM((nheads, tq, 1), jnp.float32),      # running sum
                pltpu.VMEM((nheads, tq, nhid), jnp.float32),   # running numerator
            ],
        ),
        compiler_params=pltpu.CompilerParams(
            # q tiles are independent (second TensorCore on v7x);
            # k (softmax stream) is a reduction.
            dimension_semantics=("parallel", "arbitrary"),
            vmem_limit_bytes=vmem_limit),
    )(adj, wh, f_src, f_dst_t)
    # TODO(synk): F.dropout on inputs / attention / output omitted (eval mode).
    return out


def gat_reference(x, adj, W, a, *, alpha):
    nheads, _, nhid = W.shape
    adj = adj.astype(jnp.float32)
    outs = []
    for h in range(nheads):
        Wh = x @ W[h]
        Wh1 = Wh @ a[h][:nhid, :]
        Wh2 = Wh @ a[h][nhid:, :]
        e = Wh1 + Wh2.T
        e = jnp.where(e > 0, e, alpha * e)
        att = jnp.where(adj > 0, e, jnp.full_like(e, -9.0e15))
        att = jax.nn.softmax(att, axis=1)
        outs.append((adj * att) @ Wh)
    return jnp.mean(jnp.stack(outs, axis=0), axis=0)


if __name__ == "__main__":
    # Small but non-trivial: 256 nodes, 4 heads.
    N, nfeat, nhid, nheads = 256, 64, 8, 4
    alpha = 0.2

    key = jax.random.PRNGKey(0)
    k1, k2, k3, k4 = jax.random.split(key, 4)

    x = jax.random.normal(k1, (N, nfeat), dtype=jnp.float32)

    adj = (jax.random.uniform(k2, (N, N)) > 0.7).astype(jnp.float32)
    adj = jnp.maximum(adj, jnp.eye(N, dtype=jnp.float32))  # self-loops

    # xavier_uniform_ with gain=1.414 (deterministic synthetic init)
    lim_w = 1.414 * (6.0 / (nfeat + nhid)) ** 0.5
    W = jax.random.uniform(k3, (nheads, nfeat, nhid),
                           minval=-lim_w, maxval=lim_w, dtype=jnp.float32)
    lim_a = 1.414 * (6.0 / (2 * nhid + 1)) ** 0.5
    a = jax.random.uniform(k4, (nheads, 2 * nhid, 1),
                           minval=-lim_a, maxval=lim_a, dtype=jnp.float32)

    ref = gat_reference(x, adj, W, a, alpha=alpha)

    # 1) f32 path, 128x128 tiles -> 2x2 grid exercises the streaming softmax.
    out = jax.block_until_ready(
        gat_forward(x, adj, W, a, alpha=alpha, tile_q=128, tile_k=128))
    assert out.shape == (N, nhid)
    assert jnp.allclose(out, ref, atol=1e-4, rtol=1e-4), "f32 tiled mismatch"

    # 2) int8 adjacency (4x less HBM traffic; lossless for a 0/1 mask) + big tiles.
    out_i8 = jax.block_until_ready(
        gat_forward(x, adj.astype(jnp.int8), W, a, alpha=alpha))
    assert jnp.allclose(out_i8, ref, atol=1e-4, rtol=1e-4), "int8-adj mismatch"

    # 3) bf16 MXU operands for the value matmul (v6e/v7x path; keep f32 on v5e).
    out_bf16 = jax.block_until_ready(
        gat_forward(x, adj.astype(jnp.int8), W, a, alpha=alpha,
                    mm_dtype=jnp.bfloat16))
    assert jnp.allclose(out_bf16, ref, atol=5e-2, rtol=5e-2), "bf16 mismatch"

    print("KERNEL_OK")
</pallas_src>

<mosaic_0001>
module attributes {stable_mosaic.version = 11 : i64} {
  func.func @gat_project_kernel(%arg0: i32, %arg1: memref<128x64xf32, #tpu.memory_space<vmem>>, %arg2: memref<64x32xf32, #tpu.memory_space<vmem>>, %arg3: memref<32x4xf32, #tpu.memory_space<vmem>>, %arg4: memref<4x32xf32, #tpu.memory_space<vmem>>, %arg5: memref<128x32xf32, #tpu.memory_space<vmem>>, %arg6: memref<128x4xf32, #tpu.memory_space<vmem>>, %arg7: memref<4x128xf32, #tpu.memory_space<vmem>>) attributes {dimension_semantics = [#tpu.dimension_semantics<parallel>], iteration_bounds = array<i64: 2>, scalar_prefetch = 0 : i64, scratch_operands = 0 : i64, tpu.core_type = #tpu.core_type<tc>, window_params = [{transform_indices = @transform_0, window_bounds = array<i64: 128, 64>}, {pipeline_mode = #tpu.pipeline_mode<synchronous>, transform_indices = @transform_1, window_bounds = array<i64: 64, 32>}, {pipeline_mode = #tpu.pipeline_mode<synchronous>, transform_indices = @transform_2, window_bounds = array<i64: 32, 4>}, {pipeline_mode = #tpu.pipeline_mode<synchronous>, transform_indices = @transform_3, window_bounds = array<i64: 4, 32>}, {transform_indices = @transform_4, window_bounds = array<i64: 128, 32>}, {transform_indices = @transform_5, window_bounds = array<i64: 128, 4>}, {transform_indices = @transform_6, window_bounds = array<i64: 4, 128>}]} {
    %c0 = arith.constant 0 : index
    %c0_0 = arith.constant 0 : index
    %0 = vector.load %arg1[%c0, %c0_0] : memref<128x64xf32, #tpu.memory_space<vmem>>, vector<128x64xf32>
    %c0_1 = arith.constant 0 : index
    %c0_2 = arith.constant 0 : index
    %1 = vector.load %arg2[%c0_1, %c0_2] : memref<64x32xf32, #tpu.memory_space<vmem>>, vector<64x32xf32>
    %cst = arith.constant dense<0.000000e+00> : vector<128x32xf32>
    %2 = tpu.matmul %0, %1, %cst {dimension_numbers = #tpu.dot_dimension_numbers<[1], [0], [0], [1], [0, 0, 1, 1], [], []>} : vector<128x64xf32>, vector<64x32xf32>, vector<128x32xf32> -> vector<128x32xf32>
    %c0_3 = arith.constant 0 : index
    %c0_4 = arith.constant 0 : index
    %3 = vector.load %arg5[%c0_3, %c0_4] : memref<128x32xf32, #tpu.memory_space<vmem>>, vector<128x32xf32>
    tpu.vector_store %arg5[%c0_3, %c0_4], %2 {strides = array<i32>} : memref<128x32xf32, #tpu.memory_space<vmem>>, vector<128x32xf32>,
    %c0_5 = arith.constant 0 : index
    %c0_6 = arith.constant 0 : index
    %4 = vector.load %arg3[%c0_5, %c0_6] : memref<32x4xf32, #tpu.memory_space<vmem>>, vector<32x4xf32>
    %cst_7 = arith.constant dense<0.000000e+00> : vector<128x4xf32>
    %5 = tpu.matmul %2, %4, %cst_7 {dimension_numbers = #tpu.dot_dimension_numbers<[1], [0], [0], [1], [0, 0, 1, 1], [], []>} : vector<128x32xf32>, vector<32x4xf32>, vector<128x4xf32> -> vector<128x4xf32>
    %c0_8 = arith.constant 0 : index
    %c0_9 = arith.constant 0 : index
    %6 = vector.load %arg6[%c0_8, %c0_9] : memref<128x4xf32, #tpu.memory_space<vmem>>, vector<128x4xf32>
    tpu.vector_store %arg6[%c0_8, %c0_9], %5 {strides = array<i32>} : memref<128x4xf32, #tpu.memory_space<vmem>>, vector<128x4xf32>,
    %c0_10 = arith.constant 0 : index
    %c0_11 = arith.constant 0 : index
    %7 = vector.load %arg4[%c0_10, %c0_11] : memref<4x32xf32, #tpu.memory_space<vmem>>, vector<4x32xf32>
    %cst_12 = arith.constant dense<0.000000e+00> : vector<4x128xf32>
    %8 = tpu.matmul %7, %2, %cst_12 {dimension_numbers = #tpu.dot_dimension_numbers<[1], [1], [0], [0], [0, 0, 1, 0], [], []>} : vector<4x32xf32>, vector<128x32xf32>, vector<4x128xf32> -> vector<4x128xf32>
    %c0_13 = arith.constant 0 : index
    %c0_14 = arith.constant 0 : index
    %9 = vector.load %arg7[%c0_13, %c0_14] : memref<4x128xf32, #tpu.memory_space<vmem>>, vector<4x128xf32>
    tpu.vector_store %arg7[%c0_13, %c0_14], %8 {strides = array<i32>} : memref<4x128xf32, #tpu.memory_space<vmem>>, vector<4x128xf32>,
    return
  }
  func.func @transform_0(%arg0: i32) -> (i32, i32) {
    %c0_i32 = arith.constant 0 : i32
    %c0_i32_0 = arith.constant 0 : i32
    return %arg0, %c0_i32 : i32, i32
  }
  func.func @transform_1(%arg0: i32) -> (i32, i32) {
    %c0_i32 = arith.constant 0 : i32
    %c0_i32_0 = arith.constant 0 : i32
    %c0_i32_1 = arith.constant 0 : i32
    return %c0_i32, %c0_i32_0 : i32, i32
  }
  func.func @transform_2(%arg0: i32) -> (i32, i32) {
    %c0_i32 = arith.constant 0 : i32
    %c0_i32_0 = arith.constant 0 : i32
    %c0_i32_1 = arith.constant 0 : i32
    return %c0_i32, %c0_i32_0 : i32, i32
  }
  func.func @transform_3(%arg0: i32) -> (i32, i32) {
    %c0_i32 = arith.constant 0 : i32
    %c0_i32_0 = arith.constant 0 : i32
    %c0_i32_1 = arith.constant 0 : i32
    return %c0_i32, %c0_i32_0 : i32, i32
  }
  func.func @transform_4(%arg0: i32) -> (i32, i32) {
    %c0_i32 = arith.constant 0 : i32
    %c0_i32_0 = arith.constant 0 : i32
    return %arg0, %c0_i32 : i32, i32
  }
  func.func @transform_5(%arg0: i32) -> (i32, i32) {
    %c0_i32 = arith.constant 0 : i32
    %c0_i32_0 = arith.constant 0 : i32
    return %arg0, %c0_i32 : i32, i32
  }
  func.func @transform_6(%arg0: i32) -> (i32, i32) {
    %c0_i32 = arith.constant 0 : i32
    %c0_i32_0 = arith.constant 0 : i32
    return %c0_i32, %arg0 : i32, i32
  }
}

</mosaic_0001>

<llo_original>
// kernel: tpu_custom_call.1
$region0: #{tpu_custom_call.1}
  #allocation0 [shape = 'u32[]', space=smem, size = 0x4, offset = 0x4, fixed_abs, tag = 'smem constant byte address 0x4 - core index']
  #allocation1 [shape = 'u32[144,128]{1,0:T(1,128)}', space=vmem, size = 0x12000, scoped, tag = 'internal scratch']
  %s0 = inlined_call_operand.vmem [shape: f32[256,64], index: 0, kind: input, shape index: {}]
  %s1 = inlined_call_operand.vmem [shape: f32[64,32], index: 1, kind: input, shape index: {}]
  %s2 = inlined_call_operand.vmem [shape: f32[32,4], index: 2, kind: input, shape index: {}]
  %s3 = inlined_call_operand.vmem [shape: f32[4,32], index: 3, kind: input, shape index: {}]
  %s4 = inlined_call_operand.vmem [shape: f32[256,32], index: 4, kind: output, shape index: {0}]
  %s5 = inlined_call_operand.vmem [shape: f32[256,4], index: 5, kind: output, shape index: {1}]
  %s6 = inlined_call_operand.hbm [shape: f32[4,256], index: 6, kind: output, shape index: {2}]
  %7 = xla_tuple %s4, %s5, %s6
  %s8 = sld [smem:[#allocation0]]
  $region65: #{tpu_custom_call.1} parent=0
    _
  %s10 = ssub.s32 1, %s8
  %s11 = scalar_select 0, %s10, %s8
  $region1: #{tpu_custom_call.1} parent=0
    #allocation2 [shape = 'u8[4096]{0}', space=vmem, size = 0x1000, scoped, tag = 'output window, operand 2']
    #allocation3 [shape = 's32[2]{0}', space=sflag, size = 0x8, scoped, tag = 'scoped memory for tpu_custom_call.1']
    %12 = vsyncpa [#allocation3], 0
    %s13 = scalar_lea.sflag [#allocation3], 1
    %14 = vsyncpa %s13, 0
    loop: start=0, step=1, limit=4
    $region2: #{tpu_custom_call.1} parent=1 // loop_pre_header
      _
    $region3: #{tpu_custom_call.1} parent=1 // loop_header
      %s16 = sphi 0, %s20
      %p17 = scmp.ge.s32.totalorder %s16, 4
      %s26 = sphi 0, %s28
      %s29 = sphi 0, %s26
      %s30 = sphi 0, %s29
      %s46 = sphi 0, %s30
      %s50 = sphi 0, %s50
      %s52 = sphi 0, %s50
      %s53 = sphi 0, %s52
      %s67 = sphi 0, %s53
      %s71 = sphi 0, %s71
      %s73 = sphi 0, %s71
      %s74 = sphi 0, %s73
      %s88 = sphi 0, %s74
      %s92 = sphi 0, %s92
      %s94 = sphi 0, %s92
      %s95 = sphi 0, %s94
      %s109 = sphi 0, %s95
      %s115 = sphi 0, %s117
      %s118 = sphi 0, %s115
      %s119 = sphi 0, %s118
      %s135 = sphi 0, %s119
      %s141 = sphi 0, %s143
      %s144 = sphi 0, %s141
      %s145 = sphi 0, %s144
      %s161 = sphi 0, %s145
      %s167 = sphi 0, %s169
      %s170 = sphi 0, %s167
      %s171 = sphi 0, %s170
      %s187 = sphi 0, %s171
    $region4: #{tpu_custom_call.1} parent=1 // loop_header_branch
      %19 = sbr.rel (%p17) target = $region8
    $region5: #{tpu_custom_call.1} parent=1 // loop_body
      %s21 = ssub.s32 %s16, 1
      %s22 = ssub.s32 %s16, 2
      %s23 = sadd.s32 %s16, 1
      %s24 = ssub.s32 %s16, %s23
      %p25 = scmp.eq.s32.totalorder %s24, 0
      %s27 = sadd.s32 %s26, 1
      %s28 = scalar_select %p25, %s26, %s27
      %p31 = pneg %p25
      %p32 = scmp.eq.s32.totalorder %s16, 1
      %p33 = por %p31, %p32
      %p34 = scmp.ne.s32.totalorder %s26, %s29
      %p35 = scmp.eq.s32.totalorder %s16, 0
      %p36 = por %p34, %p35
      %p37 = scmp.ne.s32.totalorder %s26, %s29
      %p38 = scmp.eq.s32.totalorder %s21, 1
      %p39 = por %p37, %p38
      %p40 = scmp.ne.s32.totalorder %s29, %s30
      %p41 = scmp.eq.s32.totalorder %s21, 0
      %p42 = por %p40, %p41
      %p43 = scmp.ne.s32.totalorder %s29, %s30
      %p44 = scmp.eq.s32.totalorder %s22, 1
      %p45 = por %p43, %p44
      %p47 = scmp.ne.s32.totalorder %s30, %s46
      %p48 = scmp.eq.s32.totalorder %s22, 0
      %p49 = por %p47, %p48
      %s51 = sadd.s32 %s50, 1
      %p54 = scmp.eq.s32.totalorder %s16, 1
      %p55 = scmp.ne.s32.totalorder %s50, %s52
      %p56 = scmp.eq.s32.totalorder %s16, 0
      %p57 = por %p55, %p56
      %p58 = scmp.ne.s32.totalorder %s50, %s52
      %p59 = scmp.eq.s32.totalorder %s21, 1
      %p60 = por %p58, %p59
      %p61 = scmp.ne.s32.totalorder %s52, %s53
      %p62 = scmp.eq.s32.totalorder %s21, 0
      %p63 = por %p61, %p62
      %p64 = scmp.ne.s32.totalorder %s52, %s53
      %p65 = scmp.eq.s32.totalorder %s22, 1
      %p66 = por %p64, %p65
      %p68 = scmp.ne.s32.totalorder %s53, %s67
      %p69 = scmp.eq.s32.totalorder %s22, 0
      %p70 = por %p68, %p69
      %s72 = sadd.s32 %s71, 1
      %p75 = scmp.eq.s32.totalorder %s16, 1
      %p76 = scmp.ne.s32.totalorder %s71, %s73
      %p77 = scmp.eq.s32.totalorder %s16, 0
      %p78 = por %p76, %p77
      %p79 = scmp.ne.s32.totalorder %s71, %s73
      %p80 = scmp.eq.s32.totalorder %s21, 1
      %p81 = por %p79, %p80
      %p82 = scmp.ne.s32.totalorder %s73, %s74
      %p83 = scmp.eq.s32.totalorder %s21, 0
      %p84 = por %p82, %p83
      %p85 = scmp.ne.s32.totalorder %s73, %s74
      %p86 = scmp.eq.s32.totalorder %s22, 1
      %p87 = por %p85, %p86
      %p89 = scmp.ne.s32.totalorder %s74, %s88
      %p90 = scmp.eq.s32.totalorder %s22, 0
      %p91 = por %p89, %p90
      %s93 = sadd.s32 %s92, 1
      %p96 = scmp.eq.s32.totalorder %s16, 1
      %p97 = scmp.ne.s32.totalorder %s92, %s94
      %p98 = scmp.eq.s32.totalorder %s16, 0
      %p99 = por %p97, %p98
      %p100 = scmp.ne.s32.totalorder %s92, %s94
      %p101 = scmp.eq.s32.totalorder %s21, 1
      %p102 = por %p100, %p101
      %p103 = scmp.ne.s32.totalorder %s94, %s95
      %p104 = scmp.eq.s32.totalorder %s21, 0
      %p105 = por %p103, %p104
      %p106 = scmp.ne.s32.totalorder %s94, %s95
      %p107 = scmp.eq.s32.totalorder %s22, 1
      %p108 = por %p106, %p107
      %p110 = scmp.ne.s32.totalorder %s95, %s109
      %p111 = scmp.eq.s32.totalorder %s22, 0
      %p112 = por %p110, %p111
      %s113 = ssub.s32 %s16, %s23
      %p114 = scmp.eq.s32.totalorder %s113, 0
      %s116 = sadd.s32 %s115, 1
      %s117 = scalar_select %p114, %s115, %s116
      %p120 = pneg %p114
      %p121 = scmp.eq.s32.totalorder %s16, 1
      %p122 = por %p120, %p121
      %p123 = scmp.ne.s32.totalorder %s115, %s118
      %p124 = scmp.eq.s32.totalorder %s16, 0
      %p125 = por %p123, %p124
      %p126 = scmp.ne.s32.totalorder %s115, %s118
      %p127 = scmp.eq.s32.totalorder %s21, 1
      %p128 = por %p126, %p127
      %p129 = scmp.ne.s32.totalorder %s118, %s119
      %p130 = scmp.eq.s32.totalorder %s21, 0
      %p131 = por %p129, %p130
      %p132 = scmp.ne.s32.totalorder %s118, %s119
      %p133 = scmp.eq.s32.totalorder %s22, 1
      %p134 = por %p132, %p133
      %p136 = scmp.ne.s32.totalorder %s119, %s135
      %p137 = scmp.eq.s32.totalorder %s22, 0
      %p138 = por %p136, %p137
      %s139 = ssub.s32 %s16, %s23
      %p140 = scmp.eq.s32.totalorder %s139, 0
      %s142 = sadd.s32 %s141, 1
      %s143 = scalar_select %p140, %s141, %s142
      %p146 = pneg %p140
      %p147 = scmp.eq.s32.totalorder %s16, 1
      %p148 = por %p146, %p147
      %p149 = scmp.ne.s32.totalorder %s141, %s144
      %p150 = scmp.eq.s32.totalorder %s16, 0
      %p151 = por %p149, %p150
      %p152 = scmp.ne.s32.totalorder %s141, %s144
      %p153 = scmp.eq.s32.totalorder %s21, 1
      %p154 = por %p152, %p153
      %p155 = scmp.ne.s32.totalorder %s144, %s145
      %p156 = scmp.eq.s32.totalorder %s21, 0
      %p157 = por %p155, %p156
      %p158 = scmp.ne.s32.totalorder %s144, %s145
      %p159 = scmp.eq.s32.totalorder %s22, 1
      %p160 = por %p158, %p159
      %p162 = scmp.ne.s32.totalorder %s145, %s161
      %p163 = scmp.eq.s32.totalorder %s22, 0
      %p164 = por %p162, %p163
      %s165 = ssub.s32 %s16, %s23
      %p166 = scmp.eq.s32.totalorder %s165, 0
      %s168 = sadd.s32 %s167, 1
      %s169 = scalar_select %p166, %s167, %s168
      %p172 = pneg %p166
      %p173 = scmp.eq.s32.totalorder %s16, 1
      %p174 = por %p172, %p173
      %p175 = scmp.ne.s32.totalorder %s167, %s170
      %p176 = scmp.eq.s32.totalorder %s16, 0
      %p177 = por %p175, %p176
      %p178 = scmp.ne.s32.totalorder %s167, %s170
      %p179 = scmp.eq.s32.totalorder %s21, 1
      %p180 = por %p178, %p179
      %p181 = scmp.ne.s32.totalorder %s170, %s171
      %p182 = scmp.eq.s32.totalorder %s21, 0
      %p183 = por %p181, %p182
      %p184 = scmp.ne.s32.totalorder %s170, %s171
      %p185 = scmp.eq.s32.totalorder %s22, 1
      %p186 = por %p184, %p185
      %p188 = scmp.ne.s32.totalorder %s171, %s187
      %p189 = scmp.eq.s32.totalorder %s22, 0
      %p190 = por %p188, %p189
      %p191 = scmp.le.s32.totalorder 1, %s16
      %p192 = scmp.lt.s32.totalorder %s16, 3
      %p193 = pnand %p191, %p192
      %p194 = pneg %p193
      // Predicated region
      $region9: #{tpu_custom_call.1} parent=5 // pred_check
        _
      $region10: #{tpu_custom_call.1} parent=5 // pred_check_branch
        %196 = sbr.rel (%p193) target = $region12
      $region11: #{tpu_custom_call.1} parent=5 // pred_region
        %s197 = ssub.s32 %s16, 1
        // Predicated region
        $region13: #{tpu_custom_call.1} parent=11 // pred_check
          %p198 = pneg %p63
        $region14: #{tpu_custom_call.1} parent=11 // pred_check_branch
          %200 = sbr.rel (%p198) target = $region16
        $region15: #{tpu_custom_call.1} parent=11 // pred_region
          _
        $region16: #{tpu_custom_call.1} parent=11 // pred_fallthru
          _
        // Predicated region
        $region17: #{tpu_custom_call.1} parent=11 // pred_check
          %p201 = pneg %p84
        $region18: #{tpu_custom_call.1} parent=11 // pred_check_branch
          %203 = sbr.rel (%p201) target = $region20
        $region19: #{tpu_custom_call.1} parent=11 // pred_region
          _
        $region20: #{tpu_custom_call.1} parent=11 // pred_fallthru
          _
        // Predicated region
        $region21: #{tpu_custom_call.1} parent=11 // pred_check
          %p204 = pneg %p105
        $region22: #{tpu_custom_call.1} parent=11 // pred_check_branch
          %206 = sbr.rel (%p204) target = $region24
        $region23: #{tpu_custom_call.1} parent=11 // pred_region
          _
        $region24: #{tpu_custom_call.1} parent=11 // pred_fallthru
          _
      $region12: #{tpu_custom_call.1} parent=5 // pred_fallthru
        _
      %p207 = scmp.lt.s32.totalorder %s16, 2
      // Predicated region
      $region25: #{tpu_custom_call.1} parent=5 // pred_check
        %p208 = pneg %p207
      $region26: #{tpu_custom_call.1} parent=5 // pred_check_branch
        %210 = sbr.rel (%p208) target = $region28
      $region27: #{tpu_custom_call.1} parent=5 // pred_region
        // Predicated region
        $region29: #{tpu_custom_call.1} parent=27 // pred_check
          %p211 = pneg %p36
        $region30: #{tpu_custom_call.1} parent=27 // pred_check_branch
          %213 = sbr.rel (%p211) target = $region32
        $region31: #{tpu_custom_call.1} parent=27 // pred_region
          %s214 = smul.u32 16, %s16
          %p215 = scmp.lt.s32.totalorder %s214, 31
          %s216 = scalar_select %p215, %s214, 31
          %s217 = smul.addr %s216, 8
          %s218 = scalar_lea.vmem %s0, %s217
          %s219 = smul.u32 16, %s16
        $region32: #{tpu_custom_call.1} parent=27 // pred_fallthru
          _
      $region28: #{tpu_custom_call.1} parent=5 // pred_fallthru
        _
      %p220 = scmp.le.s32.totalorder 1, %s16
      %p221 = scmp.lt.s32.totalorder %s16, 3
      %p222 = pnand %p220, %p221
      %p223 = pneg %p222
      // Predicated region
      $region33: #{tpu_custom_call.1} parent=5 // pred_check
        _
      $region34: #{tpu_custom_call.1} parent=5 // pred_check_branch
        %225 = sbr.rel (%p222) target = $region36
      $region35: #{tpu_custom_call.1} parent=5 // pred_region
        %s226 = ssub.s32 %s16, 1
        %s227 = smul.u32 16, %s21
        %p228 = scmp.lt.s32.totalorder %s227, 31
        %s229 = scalar_select %p228, %s227, 31
        %s230 = smul.addr %s229, 8
        %s231 = scalar_lea.vmem %s0, %s230
        %p232 = pneg %p42
        %p233 = pneg %p39
        %p234 = pneg %p63
        %p235 = pneg %p60
        %p236 = pneg %p84
        %p237 = pneg %p81
        %p238 = pneg %p105
        %p239 = pneg %p102
        %p240 = pneg %p131
        %p241 = pneg %p128
        %s242 = smul.u32 16, %s21
        %p243 = scmp.lt.s32.totalorder %s242, 31
        %s244 = scalar_select %p243, %s242, 31
        %s245 = smul.addr %s244, 8
        %s246 = scalar_lea.vmem %s4, %s245
        %p247 = pneg %p157
        %p248 = pneg %p154
        %s249 = smul.u32 16, %s21
        %p250 = scmp.lt.s32.totalorder %s249, 31
        %s251 = scalar_select %p250, %s249, 31
        %s252 = smul.addr %s251, 8
        %s253 = scalar_lea.vmem %s5, %s252
        %p254 = pneg %p183
        %p255 = pneg %p180
        %s256 = sand.u32 %s170, 1
        %s257 = scalar_lea.sflag [#allocation3], %s256
        %s258 = sand.u32 %s170, 1
        %s259 = smul.addr %s258, 4
        %s260 = scalar_lea.vmem [#allocation2], %s259
        %s261 = smul.u32 16, %s21
        %p262 = scmp.lt.s32.totalorder %s261, 31
        %s263 = scalar_select %p262, %s261, 31
        %s264 = smul.addr %s263, 8
        %s265 = scalar_lea.vmem %s0, %s264
        %s266 = smul.u32 16, %s21
        %s267 = smul.u32 16, %s21
        %p268 = scmp.lt.s32.totalorder %s267, 31
        %s269 = scalar_select %p268, %s267, 31
        %s270 = smul.addr %s269, 8
        %s271 = scalar_lea.vmem %s4, %s270
        %s272 = smul.u32 16, %s21
        %s273 = smul.u32 16, %s21
        %p274 = scmp.lt.s32.totalorder %s273, 31
        %s275 = scalar_select %p274, %s273, 31
        %s276 = smul.addr %s275, 8
        %s277 = scalar_lea.vmem %s5, %s276
        %s278 = smul.u32 16, %s21
        %v279 = vld [vmem:[%s265] sm:$0xff]
        %v280 = vld [vmem:[%s265 + $0x8] sm:$0xff]
        %v281 = vld [vmem:[%s265 + $0x10] sm:$0xff]
        %v282 = vld [vmem:[%s265 + $0x18] sm:$0xff]
        %v283 = vld [vmem:[%s265 + $0x20] sm:$0xff]
        %v284 = vld [vmem:[%s265 + $0x28] sm:$0xff]
        %v285 = vld [vmem:[%s265 + $0x30] sm:$0xff]
        %v286 = vld [vmem:[%s265 + $0x38] sm:$0xff]
        %v287 = vld [vmem:[%s265 + $0x40] sm:$0xff]
        %v288 = vld [vmem:[%s265 + $0x48] sm:$0xff]
        %v289 = vld [vmem:[%s265 + $0x50] sm:$0xff]
        %v290 = vld [vmem:[%s265 + $0x58] sm:$0xff]
        %v291 = vld [vmem:[%s265 + $0x60] sm:$0xff]
        %v292 = vld [vmem:[%s265 + $0x68] sm:$0xff]
        %v293 = vld [vmem:[%s265 + $0x70] sm:$0xff]
        %v294 = vld [vmem:[%s265 + $0x78] sm:$0xff]
        %v295 = vld [vmem:[%s1] sm:$0xff]
        %v296 = vld [vmem:[%s1 + $0x8] sm:$0xff]
        %v297 = vld [vmem:[%s1 + $0x10] sm:$0xff]
        %v298 = vld [vmem:[%s1 + $0x18] sm:$0xff]
        %v299 = vld [vmem:[%s1 + $0x20] sm:$0xff]
        %v300 = vld [vmem:[%s1 + $0x28] sm:$0xff]
        %v301 = vld [vmem:[%s1 + $0x30] sm:$0xff]
        %v302 = vld [vmem:[%s1 + $0x38] sm:$0xff]
        %vm303 = vcmask 523264
        %v305 = vsel %vm303, %v279, 0
        %v308 = vsel %vm303, %v280, 0
        %v311 = vsel %vm303, %v281, 0
        %v314 = vsel %vm303, %v282, 0
        %v317 = vsel %vm303, %v283, 0
        %v320 = vsel %vm303, %v284, 0
        %v323 = vsel %vm303, %v285, 0
        %v326 = vsel %vm303, %v286, 0
        %v329 = vsel %vm303, %v287, 0
        %v332 = vsel %vm303, %v288, 0
        %v335 = vsel %vm303, %v289, 0
        %v338 = vsel %vm303, %v290, 0
        %v341 = vsel %vm303, %v291, 0
        %v344 = vsel %vm303, %v292, 0
        %v347 = vsel %vm303, %v293, 0
        %v350 = vsel %vm303, %v294, 0
        %352 = vmatprep.subr.mxu0 0.0
        %353 = vmatpush1.msra.mxu0 %v295
        %354 = vmatprep.subr.mxu0 0.0
        %355 = vmatpush1.msra.mxu0 %v296
        %356 = vmatprep.subr.mxu0 0.0
        %357 = vmatpush1.msra.mxu0 %v297
        %358 = vmatprep.subr.mxu0 0.0
        %359 = vmatpush1.msra.mxu0 %v298
        %360 = vmatprep.subr.mxu0 0.0
        %361 = vmatpush1.msra.mxu0 %v299
        %362 = vmatprep.subr.mxu0 0.0
        %363 = vmatpush1.msra.mxu0 %v300
        %364 = vmatprep.subr.mxu0 0.0
        %365 = vmatpush1.msra.mxu0 %v301
        %366 = vmatprep.subr.mxu0 0.0
        %367 = vmatpush1.msra.mxu0 %v302
        %368 = vmatprep.subr.mxu0 0.0
        %369 = vmatpush1.msra.mxu0 0.0
        %370 = vmatprep.subr.mxu0 0.0
        %371 = vmatpush1.msra.mxu0 0.0
        %372 = vmatprep.subr.mxu0 0.0
        %373 = vmatpush1.msra.mxu0 0.0
        %374 = vmatprep.subr.mxu0 0.0
        %375 = vmatpush1.msra.mxu0 0.0
        %376 = vmatprep.subr.mxu0 0.0
        %377 = vmatpush1.msra.mxu0 0.0
        %378 = vmatprep.subr.mxu0 0.0
        %379 = vmatpush1.msra.mxu0 0.0
        %380 = vmatprep.subr.mxu0 0.0
        %381 = vmatpush1.msra.mxu0 0.0
        %382 = vmatprep.subr.mxu0 0.0
        %383 = vmatpush1.msra.mxu0 0.0
        %384 = vmatprep.subr.mxu0 0.0
        %385 = vmatpush1.msra.mxu0 0.0
        %386 = vmatprep.subr.mxu0 0.0
        %387 = vmatpush1.msra.mxu0 0.0
        %388 = vmatprep.subr.mxu0 0.0
        %389 = vmatpush1.msra.mxu0 0.0
        %390 = vmatprep.subr.mxu0 0.0
        %391 = vmatpush1.msra.mxu0 0.0
        %392 = vmatprep.subr.mxu0 0.0
        %393 = vmatpush1.msra.mxu0 0.0
        %394 = vmatprep.subr.mxu0 0.0
        %395 = vmatpush1.msra.mxu0 0.0
        %396 = vmatprep.subr.mxu0 0.0
        %397 = vmatpush1.msra.mxu0 0.0
        %398 = vmatprep.subr.mxu0 0.0
        %399 = vmatpush1.msra.mxu0 0.0
        %400 = vmatprep.subr.mxu0 0.0
        %401 = vmatpush1.msra.mxu0 0.0
        %402 = vmatprep.subr.mxu0 0.0
        %403 = vmatpush1.msra.mxu0 0.0
        %404 = vmatprep.subr.mxu0 0.0
        %405 = vmatpush1.msra.mxu0 0.0
        %406 = vmatprep.subr.mxu0 0.0
        %407 = vmatpush1.msra.mxu0 0.0
        %408 = vmatprep.subr.mxu0 0.0
        %409 = vmatpush1.msra.mxu0 0.0
        %410 = vmatprep.subr.mxu0 0.0
        %411 = vmatpush1.msra.mxu0 0.0
        %412 = vmatprep.subr.mxu0 0.0
        %413 = vmatpush1.msra.mxu0 0.0
        %414 = vmatprep.subr.mxu0 0.0
        %415 = vmatpush1.msra.mxu0 0.0
        %416 = vmatprep.mubr.f32.mxu0 0.0
        %417 = vmatmul.mubr.f32.gmra.mrb[0].mxu0 %v305
        %v418 = vpop.f32.mrb[0].mxu0
        %v419 = vadd.f32 0.0, %v418
        %v420 = vpop.f32.mrb[0].mxu0
        %421 = vmatprep.mubr.f32.mxu0 0.0
        %422 = vmatmul.mubr.f32.gmra.mrb[0].mxu0 %v308
        %v423 = vpop.f32.mrb[0].mxu0
        %v424 = vadd.f32 0.0, %v423
        %v425 = vpop.f32.mrb[0].mxu0
        %426 = vmatprep.mubr.f32.mxu0 0.0
        %427 = vmatmul.mubr.f32.gmra.mrb[0].mxu0 %v311
        %v428 = vpop.f32.mrb[0].mxu0
        %v429 = vadd.f32 0.0, %v428
        %v430 = vpop.f32.mrb[0].mxu0
        %431 = vmatprep.mubr.f32.mxu0 0.0
        %432 = vmatmul.mubr.f32.gmra.mrb[0].mxu0 %v314
        %v433 = vpop.f32.mrb[0].mxu0
        %v434 = vadd.f32 0.0, %v433
        %v435 = vpop.f32.mrb[0].mxu0
        %436 = vmatprep.mubr.f32.mxu0 0.0
        %437 = vmatmul.mubr.f32.gmra.mrb[0].mxu0 %v317
        %v438 = vpop.f32.mrb[0].mxu0
        %v439 = vadd.f32 0.0, %v438
        %v440 = vpop.f32.mrb[0].mxu0
        %441 = vmatprep.mubr.f32.mxu0 0.0
        %442 = vmatmul.mubr.f32.gmra.mrb[0].mxu0 %v320
        %v443 = vpop.f32.mrb[0].mxu0
        %v444 = vadd.f32 0.0, %v443
        %v445 = vpop.f32.mrb[0].mxu0
        %446 = vmatprep.mubr.f32.mxu0 0.0
        %447 = vmatmul.mubr.f32.gmra.mrb[0].mxu0 %v323
        %v448 = vpop.f32.mrb[0].mxu0
        %v449 = vadd.f32 0.0, %v448
        %v450 = vpop.f32.mrb[0].mxu0
        %451 = vmatprep.mubr.f32.mxu0 0.0
        %452 = vmatmul.mubr.f32.gmra.mrb[0].mxu0 %v326
        %v453 = vpop.f32.mrb[0].mxu0
        %v454 = vadd.f32 0.0, %v453
        %v455 = vpop.f32.mrb[0].mxu0
        %456 = vmatprep.mubr.f32.mxu0 0.0
        %457 = vmatmul.mubr.f32.gmra.mrb[0].mxu0 %v329
        %v458 = vpop.f32.mrb[0].mxu0
        %v459 = vadd.f32 0.0, %v458
        %v460 = vpop.f32.mrb[0].mxu0
        %461 = vmatprep.mubr.f32.mxu0 0.0
        %462 = vmatmul.mubr.f32.gmra.mrb[0].mxu0 %v332
        %v463 = vpop.f32.mrb[0].mxu0
        %v464 = vadd.f32 0.0, %v463
        %v465 = vpop.f32.mrb[0].mxu0
        %466 = vmatprep.mubr.f32.mxu0 0.0
        %467 = vmatmul.mubr.f32.gmra.mrb[0].mxu0 %v335
        %v468 = vpop.f32.mrb[0].mxu0
        %v469 = vadd.f32 0.0, %v468
        %v470 = vpop.f32.mrb[0].mxu0
        %471 = vmatprep.mubr.f32.mxu0 0.0
        %472 = vmatmul.mubr.f32.gmra.mrb[0].mxu0 %v338
        %v473 = vpop.f32.mrb[0].mxu0
        %v474 = vadd.f32 0.0, %v473
        %v475 = vpop.f32.mrb[0].mxu0
        %476 = vmatprep.mubr.f32.mxu0 0.0
        %477 = vmatmul.mubr.f32.gmra.mrb[0].mxu0 %v341
        %v478 = vpop.f32.mrb[0].mxu0
        %v479 = vadd.f32 0.0, %v478
        %v480 = vpop.f32.mrb[0].mxu0
        %481 = vmatprep.mubr.f32.mxu0 0.0
        %482 = vmatmul.mubr.f32.gmra.mrb[0].mxu0 %v344
        %v483 = vpop.f32.mrb[0].mxu0
        %v484 = vadd.f32 0.0, %v483
        %v485 = vpop.f32.mrb[0].mxu0
        %486 = vmatprep.mubr.f32.mxu0 0.0
        %487 = vmatmul.mubr.f32.gmra.mrb[0].mxu0 %v347
        %v488 = vpop.f32.mrb[0].mxu0
        %v489 = vadd.f32 0.0, %v488
        %v490 = vpop.f32.mrb[0].mxu0
        %491 = vmatprep.mubr.f32.mxu0 0.0
        %492 = vmatmul.mubr.f32.gmra.mrb[0].mxu0 %v350
        %v493 = vpop.f32.mrb[0].mxu0
        %v494 = vadd.f32 0.0, %v493
        %v495 = vpop.f32.mrb[0].mxu0
        %496 = vdwg.mxu0
        %vm497 = vcmask 261120
        %498 = vst.msk [vmem:[%s271] sm:$0xff] %vm497, %v419
        %499 = vst.msk [vmem:[%s271 + $0x8] sm:$0xff] %vm497, %v424
        %500 = vst.msk [vmem:[%s271 + $0x10] sm:$0xff] %vm497, %v429
        %501 = vst.msk [vmem:[%s271 + $0x18] sm:$0xff] %vm497, %v434
        %502 = vst.msk [vmem:[%s271 + $0x20] sm:$0xff] %vm497, %v439
        %503 = vst.msk [vmem:[%s271 + $0x28] sm:$0xff] %vm497, %v444
        %504 = vst.msk [vmem:[%s271 + $0x30] sm:$0xff] %vm497, %v449
        %505 = vst.msk [vmem:[%s271 + $0x38] sm:$0xff] %vm497, %v454
        %506 = vst.msk [vmem:[%s271 + $0x40] sm:$0xff] %vm497, %v459
        %507 = vst.msk [vmem:[%s271 + $0x48] sm:$0xff] %vm497, %v464
        %508 = vst.msk [vmem:[%s271 + $0x50] sm:$0xff] %vm497, %v469
        %509 = vst.msk [vmem:[%s271 + $0x58] sm:$0xff] %vm497, %v474
        %510 = vst.msk [vmem:[%s271 + $0x60] sm:$0xff] %vm497, %v479
        %511 = vst.msk [vmem:[%s271 + $0x68] sm:$0xff] %vm497, %v484
        %512 = vst.msk [vmem:[%s271 + $0x70] sm:$0xff] %vm497, %v489
        %513 = vst.msk [vmem:[%s271 + $0x78] sm:$0xff] %vm497, %v494
        %v514 = vld [vmem:[%s2] sm:$0xff]
        %v515 = vld [vmem:[%s2 + $0x8] sm:$0xff]
        %v516 = vld [vmem:[%s2 + $0x10] sm:$0xff]
        %v517 = vld [vmem:[%s2 + $0x18] sm:$0xff]
        %v519 = vsel %vm497, %v419, 0
        %v522 = vsel %vm497, %v424, 0
        %v525 = vsel %vm497, %v429, 0
        %v528 = vsel %vm497, %v434, 0
        %v531 = vsel %vm497, %v439, 0
        %v534 = vsel %vm497, %v444, 0
        %v537 = vsel %vm497, %v449, 0
        %v540 = vsel %vm497, %v454, 0
        %v543 = vsel %vm497, %v459, 0
        %v546 = vsel %vm497, %v464, 0
        %v549 = vsel %vm497, %v469, 0
        %v552 = vsel %vm497, %v474, 0
        %v555 = vsel %vm497, %v479, 0
        %v558 = vsel %vm497, %v484, 0
        %v561 = vsel %vm497, %v489, 0
        %v564 = vsel %vm497, %v494, 0
        %566 = vmatprep.subr.mxu0 0.0
        %567 = vmatpush1.msra.mxu0 %v514
        %568 = vmatprep.subr.mxu0 0.0
        %569 = vmatpush1.msra.mxu0 %v515
        %570 = vmatprep.subr.mxu0 0.0
        %571 = vmatpush1.msra.mxu0 %v516
        %572 = vmatprep.subr.mxu0 0.0
        %573 = vmatpush1.msra.mxu0 %v517
        %574 = vmatprep.subr.mxu0 0.0
        %575 = vmatpush1.msra.mxu0 0.0
        %576 = vmatprep.subr.mxu0 0.0
        %577 = vmatpush1.msra.mxu0 0.0
        %578 = vmatprep.subr.mxu0 0.0
        %579 = vmatpush1.msra.mxu0 0.0
        %580 = vmatprep.subr.mxu0 0.0
        %581 = vmatpush1.msra.mxu0 0.0
        %582 = vmatprep.subr.mxu0 0.0
        %583 = vmatpush1.msra.mxu0 0.0
        %584 = vmatprep.subr.mxu0 0.0
        %585 = vmatpush1.msra.mxu0 0.0
        %586 = vmatprep.subr.mxu0 0.0
        %587 = vmatpush1.msra.mxu0 0.0
        %588 = vmatprep.subr.mxu0 0.0
        %589 = vmatpush1.msra.mxu0 0.0
        %590 = vmatprep.subr.mxu0 0.0
        %591 = vmatpush1.msra.mxu0 0.0
        %592 = vmatprep.subr.mxu0 0.0
        %593 = vmatpush1.msra.mxu0 0.0
        %594 = vmatprep.subr.mxu0 0.0
        %595 = vmatpush1.msra.mxu0 0.0
        %596 = vmatprep.subr.mxu0 0.0
        %597 = vmatpush1.msra.mxu0 0.0
        %598 = vmatprep.subr.mxu0 0.0
        %599 = vmatpush1.msra.mxu0 0.0
        %600 = vmatprep.subr.mxu0 0.0
        %601 = vmatpush1.msra.mxu0 0.0
        %602 = vmatprep.subr.mxu0 0.0
        %603 = vmatpush1.msra.mxu0 0.0
        %604 = vmatprep.subr.mxu0 0.0
        %605 = vmatpush1.msra.mxu0 0.0
        %606 = vmatprep.subr.mxu0 0.0
        %607 = vmatpush1.msra.mxu0 0.0
        %608 = vmatprep.subr.mxu0 0.0
        %609 = vmatpush1.msra.mxu0 0.0
        %610 = vmatprep.subr.mxu0 0.0
        %611 = vmatpush1.msra.mxu0 0.0
        %612 = vmatprep.subr.mxu0 0.0
        %613 = vmatpush1.msra.mxu0 0.0
        %614 = vmatprep.subr.mxu0 0.0
        %615 = vmatpush1.msra.mxu0 0.0
        %616 = vmatprep.subr.mxu0 0.0
        %617 = vmatpush1.msra.mxu0 0.0
        %618 = vmatprep.subr.mxu0 0.0
        %619 = vmatpush1.msra.mxu0 0.0
        %620 = vmatprep.subr.mxu0 0.0
        %621 = vmatpush1.msra.mxu0 0.0
        %622 = vmatprep.subr.mxu0 0.0
        %623 = vmatpush1.msra.mxu0 0.0
        %624 = vmatprep.subr.mxu0 0.0
        %625 = vmatpush1.msra.mxu0 0.0
        %626 = vmatprep.subr.mxu0 0.0
        %627 = vmatpush1.msra.mxu0 0.0
        %628 = vmatprep.subr.mxu0 0.0
        %629 = vmatpush1.msra.mxu0 0.0
        %630 = vmatprep.mubr.f32.mxu0 0.0
        %631 = vmatmul.mubr.f32.gmra.mrb[0].mxu0 %v519
        %v632 = vpop.f32.mrb[0].mxu0
        %v633 = vadd.f32 0.0, %v632
        %v634 = vpop.f32.mrb[0].mxu0
        %635 = vmatprep.mubr.f32.mxu0 0.0
        %636 = vmatmul.mubr.f32.gmra.mrb[0].mxu0 %v522
        %v637 = vpop.f32.mrb[0].mxu0
        %v638 = vadd.f32 0.0, %v637
        %v639 = vpop.f32.mrb[0].mxu0
        %640 = vmatprep.mubr.f32.mxu0 0.0
        %641 = vmatmul.mubr.f32.gmra.mrb[0].mxu0 %v525
        %v642 = vpop.f32.mrb[0].mxu0
        %v643 = vadd.f32 0.0, %v642
        %v644 = vpop.f32.mrb[0].mxu0
        %645 = vmatprep.mubr.f32.mxu0 0.0
        %646 = vmatmul.mubr.f32.gmra.mrb[0].mxu0 %v528
        %v647 = vpop.f32.mrb[0].mxu0
        %v648 = vadd.f32 0.0, %v647
        %v649 = vpop.f32.mrb[0].mxu0
        %650 = vmatprep.mubr.f32.mxu0 0.0
        %651 = vmatmul.mubr.f32.gmra.mrb[0].mxu0 %v531
        %v652 = vpop.f32.mrb[0].mxu0
        %v653 = vadd.f32 0.0, %v652
        %v654 = vpop.f32.mrb[0].mxu0
        %655 = vmatprep.mubr.f32.mxu0 0.0
        %656 = vmatmul.mubr.f32.gmra.mrb[0].mxu0 %v534
        %v657 = vpop.f32.mrb[0].mxu0
        %v658 = vadd.f32 0.0, %v657
        %v659 = vpop.f32.mrb[0].mxu0
        %660 = vmatprep.mubr.f32.mxu0 0.0
        %661 = vmatmul.mubr.f32.gmra.mrb[0].mxu0 %v537
        %v662 = vpop.f32.mrb[0].mxu0
        %v663 = vadd.f32 0.0, %v662
        %v664 = vpop.f32.mrb[0].mxu0
        %665 = vmatprep.mubr.f32.mxu0 0.0
        %666 = vmatmul.mubr.f32.gmra.mrb[0].mxu0 %v540
        %v667 = vpop.f32.mrb[0].mxu0
        %v668 = vadd.f32 0.0, %v667
        %v669 = vpop.f32.mrb[0].mxu0
        %670 = vmatprep.mubr.f32.mxu0 0.0
        %671 = vmatmul.mubr.f32.gmra.mrb[0].mxu0 %v543
        %v672 = vpop.f32.mrb[0].mxu0
        %v673 = vadd.f32 0.0, %v672
        %v674 = vpop.f32.mrb[0].mxu0
        %675 = vmatprep.mubr.f32.mxu0 0.0
        %676 = vmatmul.mubr.f32.gmra.mrb[0].mxu0 %v546
        %v677 = vpop.f32.mrb[0].mxu0
        %v678 = vadd.f32 0.0, %v677
        %v679 = vpop.f32.mrb[0].mxu0
        %680 = vmatprep.mubr.f32.mxu0 0.0
        %681 = vmatmul.mubr.f32.gmra.mrb[0].mxu0 %v549
        %v682 = vpop.f32.mrb[0].mxu0
        %v683 = vadd.f32 0.0, %v682
        %v684 = vpop.f32.mrb[0].mxu0
        %685 = vmatprep.mubr.f32.mxu0 0.0
        %686 = vmatmul.mubr.f32.gmra.mrb[0].mxu0 %v552
        %v687 = vpop.f32.mrb[0].mxu0
        %v688 = vadd.f32 0.0, %v687
        %v689 = vpop.f32.mrb[0].mxu0
        %690 = vmatprep.mubr.f32.mxu0 0.0
        %691 = vmatmul.mubr.f32.gmra.mrb[0].mxu0 %v555
        %v692 = vpop.f32.mrb[0].mxu0
        %v693 = vadd.f32 0.0, %v692
        %v694 = vpop.f32.mrb[0].mxu0
        %695 = vmatprep.mubr.f32.mxu0 0.0
        %696 = vmatmul.mubr.f32.gmra.mrb[0].mxu0 %v558
        %v697 = vpop.f32.mrb[0].mxu0
        %v698 = vadd.f32 0.0, %v697
        %v699 = vpop.f32.mrb[0].mxu0
        %700 = vmatprep.mubr.f32.mxu0 0.0
        %701 = vmatmul.mubr.f32.gmra.mrb[0].mxu0 %v561
        %v702 = vpop.f32.mrb[0].mxu0
        %v703 = vadd.f32 0.0, %v702
        %v704 = vpop.f32.mrb[0].mxu0
        %705 = vmatprep.mubr.f32.mxu0 0.0
        %706 = vmatmul.mubr.f32.gmra.mrb[0].mxu0 %v564
        %v707 = vpop.f32.mrb[0].mxu0
        %v708 = vadd.f32 0.0, %v707
        %v709 = vpop.f32.mrb[0].mxu0
        %710 = vdwg.mxu0
        %vm711 = vcmask 31744
        %712 = vst.msk [vmem:[%s277] sm:$0xff] %vm711, %v633
        %713 = vst.msk [vmem:[%s277 + $0x8] sm:$0xff] %vm711, %v638
        %714 = vst.msk [vmem:[%s277 + $0x10] sm:$0xff] %vm711, %v643
        %715 = vst.msk [vmem:[%s277 + $0x18] sm:$0xff] %vm711, %v648
        %716 = vst.msk [vmem:[%s277 + $0x20] sm:$0xff] %vm711, %v653
        %717 = vst.msk [vmem:[%s277 + $0x28] sm:$0xff] %vm711, %v658
        %718 = vst.msk [vmem:[%s277 + $0x30] sm:$0xff] %vm711, %v663
        %719 = vst.msk [vmem:[%s277 + $0x38] sm:$0xff] %vm711, %v668
        %720 = vst.msk [vmem:[%s277 + $0x40] sm:$0xff] %vm711, %v673
        %721 = vst.msk [vmem:[%s277 + $0x48] sm:$0xff] %vm711, %v678
        %722 = vst.msk [vmem:[%s277 + $0x50] sm:$0xff] %vm711, %v683
        %723 = vst.msk [vmem:[%s277 + $0x58] sm:$0xff] %vm711, %v688
        %724 = vst.msk [vmem:[%s277 + $0x60] sm:$0xff] %vm711, %v693
        %725 = vst.msk [vmem:[%s277 + $0x68] sm:$0xff] %vm711, %v698
        %726 = vst.msk [vmem:[%s277 + $0x70] sm:$0xff] %vm711, %v703
        %727 = vst.msk [vmem:[%s277 + $0x78] sm:$0xff] %vm711, %v708
        %v728 = vld [vmem:[%s3] sm:$0xf]
        %v730 = vsel %vm497, %v728, 0
        %732 = vmatprep.subr.mxu0 0.0
        %733 = vmatpush1.xpose.msra.mxu0 %v519
        %734 = vmatprep.subr.mxu0 0.0
        %735 = vmatpush1.xpose.msra.mxu0 %v522
        %736 = vmatprep.subr.mxu0 0.0
        %737 = vmatpush1.xpose.msra.mxu0 %v525
        %738 = vmatprep.subr.mxu0 0.0
        %739 = vmatpush1.xpose.msra.mxu0 %v528
        %740 = vmatprep.subr.mxu0 0.0
        %741 = vmatpush1.xpose.msra.mxu0 %v531
        %742 = vmatprep.subr.mxu0 0.0
        %743 = vmatpush1.xpose.msra.mxu0 %v534
        %744 = vmatprep.subr.mxu0 0.0
        %745 = vmatpush1.xpose.msra.mxu0 %v537
        %746 = vmatprep.subr.mxu0 0.0
        %747 = vmatpush1.xpose.msra.mxu0 %v540
        %748 = vmatprep.subr.mxu0 0.0
        %749 = vmatpush1.xpose.msra.mxu0 %v543
        %750 = vmatprep.subr.mxu0 0.0
        %751 = vmatpush1.xpose.msra.mxu0 %v546
        %752 = vmatprep.subr.mxu0 0.0
        %753 = vmatpush1.xpose.msra.mxu0 %v549
        %754 = vmatprep.subr.mxu0 0.0
        %755 = vmatpush1.xpose.msra.mxu0 %v552
        %756 = vmatprep.subr.mxu0 0.0
        %757 = vmatpush1.xpose.msra.mxu0 %v555
        %758 = vmatprep.subr.mxu0 0.0
        %759 = vmatpush1.xpose.msra.mxu0 %v558
        %760 = vmatprep.subr.mxu0 0.0
        %761 = vmatpush1.xpose.msra.mxu0 %v561
        %762 = vmatprep.subr.mxu0 0.0
        %763 = vmatpush1.xpose.msra.mxu0 %v564
        %764 = vmatprep.subr.mxu0 0.0
        %765 = vmatpush1.xpose.msra.mxu0 0.0
        %766 = vmatprep.subr.mxu0 0.0
        %767 = vmatpush1.xpose.msra.mxu0 0.0
        %768 = vmatprep.subr.mxu0 0.0
        %769 = vmatpush1.xpose.msra.mxu0 0.0
        %770 = vmatprep.subr.mxu0 0.0
        %771 = vmatpush1.xpose.msra.mxu0 0.0
        %772 = vmatprep.subr.mxu0 0.0
        %773 = vmatpush1.xpose.msra.mxu0 0.0
        %774 = vmatprep.subr.mxu0 0.0
        %775 = vmatpush1.xpose.msra.mxu0 0.0
        %776 = vmatprep.subr.mxu0 0.0
        %777 = vmatpush1.xpose.msra.mxu0 0.0
        %778 = vmatprep.subr.mxu0 0.0
        %779 = vmatpush1.xpose.msra.mxu0 0.0
        %780 = vmatprep.subr.mxu0 0.0
        %781 = vmatpush1.xpose.msra.mxu0 0.0
        %782 = vmatprep.subr.mxu0 0.0
        %783 = vmatpush1.xpose.msra.mxu0 0.0
        %784 = vmatprep.subr.mxu0 0.0
        %785 = vmatpush1.xpose.msra.mxu0 0.0
        %786 = vmatprep.subr.mxu0 0.0
        %787 = vmatpush1.xpose.msra.mxu0 0.0
        %788 = vmatprep.subr.mxu0 0.0
        %789 = vmatpush1.xpose.msra.mxu0 0.0
        %790 = vmatprep.subr.mxu0 0.0
        %791 = vmatpush1.xpose.msra.mxu0 0.0
        %792 = vmatprep.subr.mxu0 0.0
        %793 = vmatpush1.xpose.msra.mxu0 0.0
        %794 = vmatprep.subr.mxu0 0.0
        %795 = vmatpush1.xpose.msra.mxu0 0.0
        %796 = vmatprep.mubr.f32.mxu0 0.0
        %797 = vmatmul.mubr.f32.gmra.mrb[0].mxu0 %v730
        %v798 = vpop.f32.mrb[0].mxu0
        %v799 = vadd.f32 0.0, %v798
        %v800 = vpop.f32.mrb[0].mxu0
        %801 = vdwg.mxu0
        %802 = vst [vmem:[%s260] sm:$0xf] %v799
        %s803 = smul.u32 16, %s21
        %p804 = scmp.lt.s32.totalorder %s803, 31
        %s805 = scalar_select %p804, %s803, 31
        %s806 = smul.addr %s805, 8
        %s807 = scalar_lea.vmem %s4, %s806
        %s808 = smul.u32 16, %s21
        %p809 = scmp.lt.s32.totalorder %s808, 31
        %s810 = scalar_select %p809, %s808, 31
        %s811 = smul.addr %s810, 8
        %s812 = scalar_lea.vmem %s5, %s811
        %s813 = sand.u32 %s170, 1
        %s814 = scalar_lea.sflag [#allocation3], %s813
        %s815 = sand.u32 %s170, 1
        %s816 = smul.addr %s815, 4
        %s817 = scalar_lea.vmem [#allocation2], %s816
        // Predicated region
        $region37: #{tpu_custom_call.1} parent=35 // pred_check
          %p818 = pneg %p128
        $region38: #{tpu_custom_call.1} parent=35 // pred_check_branch
          %820 = sbr.rel (%p818) target = $region40
        $region39: #{tpu_custom_call.1} parent=35 // pred_region
          %s821 = smul.u32 16, %s21
        $region40: #{tpu_custom_call.1} parent=35 // pred_fallthru
          _
        // Predicated region
        $region41: #{tpu_custom_call.1} parent=35 // pred_check
          %p822 = pneg %p154
        $region42: #{tpu_custom_call.1} parent=35 // pred_check_branch
          %824 = sbr.rel (%p822) target = $region44
        $region43: #{tpu_custom_call.1} parent=35 // pred_region
          %s825 = smul.u32 16, %s21
        $region44: #{tpu_custom_call.1} parent=35 // pred_fallthru
          _
        // Predicated region
        $region45: #{tpu_custom_call.1} parent=35 // pred_check
          %p826 = pneg %p180
        $region46: #{tpu_custom_call.1} parent=35 // pred_check_branch
          %828 = sbr.rel (%p826) target = $region48
        $region47: #{tpu_custom_call.1} parent=35 // pred_region
          %s830 = ssub.s32 64, 64
          %831 = vsyncadd %s814, %s830
          %s832 = smul.addr %s21, 64
          %s833 = scalar_lea.hbm %s6, %s832
          %s835 = sshll.u32 %s817, 4
          %s836 = int_to_ptr.vmem [resolvable:$true] %s835
          %838 = dma.vmem_to_hbm [thread:$0]  %s836, 64, %s833, %s814
        $region48: #{tpu_custom_call.1} parent=35 // pred_fallthru
          _
      $region36: #{tpu_custom_call.1} parent=5 // pred_fallthru
        _
      %p839 = scmp.le.s32.totalorder 2, %s16
      // Predicated region
      $region49: #{tpu_custom_call.1} parent=5 // pred_check
        %p840 = pneg %p839
      $region50: #{tpu_custom_call.1} parent=5 // pred_check_branch
        %842 = sbr.rel (%p840) target = $region52
      $region51: #{tpu_custom_call.1} parent=5 // pred_region
        %s843 = ssub.s32 %s16, 2
        // Predicated region
        $region53: #{tpu_custom_call.1} parent=51 // pred_check
          %p844 = pneg %p134
        $region54: #{tpu_custom_call.1} parent=51 // pred_check_branch
          %846 = sbr.rel (%p844) target = $region56
        $region55: #{tpu_custom_call.1} parent=51 // pred_region
          %s847 = smul.u32 16, %s22
          %p848 = scmp.lt.s32.totalorder %s847, 31
          %s849 = scalar_select %p848, %s847, 31
          %s850 = smul.addr %s849, 8
          %s851 = scalar_lea.vmem %s4, %s850
        $region56: #{tpu_custom_call.1} parent=51 // pred_fallthru
          _
        // Predicated region
        $region57: #{tpu_custom_call.1} parent=51 // pred_check
          %p852 = pneg %p160
        $region58: #{tpu_custom_call.1} parent=51 // pred_check_branch
          %854 = sbr.rel (%p852) target = $region60
        $region59: #{tpu_custom_call.1} parent=51 // pred_region
          %s855 = smul.u32 16, %s22
          %p856 = scmp.lt.s32.totalorder %s855, 31
          %s857 = scalar_select %p856, %s855, 31
          %s858 = smul.addr %s857, 8
          %s859 = scalar_lea.vmem %s5, %s858
        $region60: #{tpu_custom_call.1} parent=51 // pred_fallthru
          _
        // Predicated region
        $region61: #{tpu_custom_call.1} parent=51 // pred_check
          %p860 = pneg %p186
        $region62: #{tpu_custom_call.1} parent=51 // pred_check_branch
          %862 = sbr.rel (%p860) target = $region64
        $region63: #{tpu_custom_call.1} parent=51 // pred_region
          %s863 = sand.u32 %s171, 1
          %s864 = scalar_lea.sflag [#allocation3], %s863
          %s865 = sand.u32 %s171, 1
          %s866 = smul.addr %s865, 4
          %s867 = scalar_lea.vmem [#allocation2], %s866
          %868 = dma.done %s864, 64
        $region64: #{tpu_custom_call.1} parent=51 // pred_fallthru
          _
      $region52: #{tpu_custom_call.1} parent=5 // pred_fallthru
        _
    $region6: #{tpu_custom_call.1} parent=1 // loop_footer
      %s20 = sadd.s32 1, %s16
    $region7: #{tpu_custom_call.1} parent=1 // loop_footer_branch
      %15 = sbr.rel target = $region3
    $region8: #{tpu_custom_call.1} parent=1 // loop_exit
      _
    %869 = vsyncpa [#allocation3], 1
    %s870 = scalar_lea.sflag [#allocation3], 1
    %871 = vsyncpa %s870, 1

</llo_original>
